<compile_context>
chip_gen: v6e
topology: v6e:2x2x1
jax: 0.10.0
libtpu: 0.0.40
codegen_flags: <defaults>
</compile_context>

<pallas_src>
import functools

import jax
import jax.numpy as jnp
from jax import lax
from jax.experimental import pallas as pl
from jax.experimental.pallas import tpu as pltpu


def _round_up(x, m):
    return (x + m - 1) // m * m


def _cdiv(a, b):
    return -(-a // b)


def _vmem_capacity_bytes():
    try:
        info = pltpu.get_tpu_info()
        cap = getattr(info, "vmem_capacity_bytes", None)
        if cap:
            return int(cap)
    except Exception:
        pass
    return 64 * 1024 * 1024  # conservative default (v7x per-TC VMEM)


# --------------------------------------------------------------------------- #
# Fused single-call kernel: conv + bias + exact GroupNorm + affine + ReLU.
# --------------------------------------------------------------------------- #
def _fused_conv_gn_relu_kernel(patch_ref, w_ref, b_ref, g_ref, bt_ref, o_ref, *,
                               p_true, p_pad, tile_p, n_tiles, eps):
    """grid=(N, T); the (1, Cout, P_pad) out block is resident across the T axis."""
    t = pl.program_id(1)
    z = jnp.dot(w_ref[...], patch_ref[0], preferred_element_type=jnp.float32)
    z = z + b_ref[...]                                   # (Cout, TP) + (Cout, 1)

    def _finalize(slab):
        # NOTE: lanes >= p_true hold bias-only padding; they MUST stay masked out
        # of the statistics here and are sliced off by the wrapper.
        cnt = float(slab.shape[0] * p_true)
        if p_pad != p_true:
            lane = lax.broadcasted_iota(jnp.int32, slab.shape, 1)
            valid = lane < p_true
            zm = jnp.where(valid, slab, 0.0)
            mean = jnp.sum(zm, keepdims=True) / cnt      # (1, 1)
            d = jnp.where(valid, slab - mean, 0.0)
        else:
            mean = jnp.sum(slab, keepdims=True) / cnt
            d = slab - mean
        var = jnp.sum(d * d, keepdims=True) / cnt        # exact two-pass variance
        a = g_ref[...] * lax.rsqrt(var + eps)            # (Cout, 1)
        c = bt_ref[...] - mean * a                       # (Cout, 1)
        o_ref[0] = jnp.maximum(slab * a + c, 0.0)

    if n_tiles == 1:
        _finalize(z)                                     # no slab round-trip needed
    else:
        col = pl.multiple_of(t * tile_p, 128)
        o_ref[0, :, pl.ds(col, tile_p)] = z              # stash z in resident block
        pl.when(t == n_tiles - 1)(lambda: _finalize(o_ref[0]))


# --------------------------------------------------------------------------- #
# Fallback two-pass kernels (per-sample slab does not fit VMEM).
# --------------------------------------------------------------------------- #
def _conv_bias_stats_kernel(patch_ref, w_ref, b_ref, z_ref, stats_ref, *,
                            p_true, tile_p, n_tiles):
    """Pass 1: z = W @ patches + bias; per-tile (sum, M2-about-tile-mean) stats."""
    t = pl.program_id(1)
    z = jnp.dot(w_ref[...], patch_ref[0], preferred_element_type=jnp.float32)
    z = z + b_ref[...]
    z_ref[0] = z.astype(z_ref.dtype)        # bf16 storage halves z HBM round trip

    cout = z.shape[0]
    row = lax.broadcasted_iota(jnp.int32, (2, 128), 0)

    def _write(s1, m2):
        # row 0 <- sum(z), row 1 <- sum((z - tile_mean)^2); combined per sample
        # with Chan's formula on the host (no E[x^2]-E[x]^2 cancellation).
        stats_ref[0, 0] = jnp.where(row == 0, s1, m2)

    def _full_tile_stats():
        inv_cnt = 1.0 / float(cout * tile_p)
        s1 = jnp.sum(z, keepdims=True)
        d = z - s1 * inv_cnt
        _write(s1, jnp.sum(d * d, keepdims=True))

    last_valid = p_true - (n_tiles - 1) * tile_p
    if last_valid == tile_p:                # no ragged tile -> no masking at all
        _full_tile_stats()
    else:
        @pl.when(t == n_tiles - 1)          # mask only the ragged last tile
        def _():
            lane = lax.broadcasted_iota(jnp.int32, z.shape, 1)
            valid = lane < last_valid
            inv_cnt = 1.0 / float(cout * last_valid)
            zm = jnp.where(valid, z, 0.0)
            s1 = jnp.sum(zm, keepdims=True)
            d = jnp.where(valid, z - s1 * inv_cnt, 0.0)
            _write(s1, jnp.sum(d * d, keepdims=True))

        @pl.when(t != n_tiles - 1)
        def _():
            _full_tile_stats()


def _norm_relu_kernel(z_ref, a_ref, c_ref, o_ref):
    """Pass 2: y = relu(z * a + c), fused scale/shift/ReLU."""
    o_ref[0] = jnp.maximum(z_ref[0].astype(jnp.float32) * a_ref[0] + c_ref[0], 0.0)


# --------------------------------------------------------------------------- #
# Wrapper.
# --------------------------------------------------------------------------- #
def conv_normalize_relu(x, weight, bias, gamma, beta, *, stride, padding,
                        compute_dtype=jnp.bfloat16, tile_p=None, eps=1e-5,
                        vmem_budget_bytes=None, force_two_pass=False):
    """x: (N, Cin, H, W) NCHW f32. weight: (Cout, Cin, KH, KW). Returns NCHW f32."""
    N, Cin, H, W = x.shape
    Cout, _, KH, KW = weight.shape
    OH = (H + 2 * padding - KH) // stride + 1
    OW = (W + 2 * padding - KW) // stride + 1
    P = OH * OW
    K = Cin * KH * KW
    in_bytes = jnp.dtype(compute_dtype).itemsize

    # ---- per-generation VMEM budgeting (v5e/v6e: 128 MiB, v7x: 64 MiB per TC).
    cap = _vmem_capacity_bytes()
    budget = (int(vmem_budget_bytes) if vmem_budget_bytes is not None
              else max(8 << 20, min(cap // 2, 48 << 20)))
    vmem_limit = int(min(cap * 3 // 4, max(32 << 20, budget + (16 << 20))))

    def _cp(sems):
        return pltpu.CompilerParams(dimension_semantics=sems,
                                    vmem_limit_bytes=vmem_limit)

    # ---- padding-aware lane tiling: pick T first so P_pad - P < 128 * T.
    # Per-lane VMEM estimate covers BOTH fallback passes plus the resident weight.
    # NOTE: Cout/K here are tiny in the demo; for real shapes pad toward 128/256 so
    # the 256x256 MXU (v6e/v7x) is occupied -- the HBM items above dominate first.
    P128 = _round_up(max(P, 1), 128)
    fixed = 2 * (Cout * K * in_bytes + 3 * Cout * 4) + (256 << 10)
    bpl = max(2 * K * in_bytes + 2 * Cout * in_bytes,    # pass 1: patches + z
              2 * Cout * in_bytes + 2 * Cout * 4)        # pass 2: z + out
    if tile_p is None:
        avail = max(budget - fixed, 128 * bpl)
        tile_p_max = max(128, (avail // bpl) // 128 * 128)
        tile_p_max = min(tile_p_max, P128)
        T = _cdiv(P128, tile_p_max)
        tile_p = _round_up(_cdiv(P, T), 128)
    else:
        tile_p = min(max(128, (int(tile_p) // 128) * 128), P128)
        T = _cdiv(P128, tile_p)
    P_pad = T * tile_p
    # NOTE: z lanes in [P, P_pad) are padding (they evaluate to the bias); they are
    # masked out of the GN statistics and sliced off at the end -- keep it that way.

    # ---- transpose-free im2col: (N, Cin, KH*KW, OH, OW) -> (N, K, P_pad); K is
    # ordered (Cin, KH, KW) to match weight.reshape(Cout, Cin*KH*KW).
    x_c = x.astype(compute_dtype)
    x_pad = jnp.pad(x_c, ((0, 0), (0, 0), (padding, padding), (padding, padding)))
    slices = [x_pad[:, :, kh:kh + stride * OH:stride, kw:kw + stride * OW:stride]
              for kh in range(KH) for kw in range(KW)]
    patches = jnp.stack(slices, axis=2).reshape(N, K, P)
    if P_pad != P:
        patches = jnp.pad(patches, ((0, 0), (0, 0), (0, P_pad - P)))

    w_mat = weight.reshape(Cout, K).astype(compute_dtype)    # (Cout, K)
    b_col = bias.reshape(Cout, 1).astype(jnp.float32)
    g_col = gamma.reshape(Cout, 1).astype(jnp.float32)
    bt_col = beta.reshape(Cout, 1).astype(jnp.float32)

    # ---- fused single-call path: z slab stays resident in VMEM (no HBM round
    # trip, exact two-pass GroupNorm). 5x slab ~ out double-buffer + temporaries.
    fused_bytes = 5 * Cout * P_pad * 4 + 2 * K * tile_p * in_bytes + fixed
    if (not force_two_pass) and fused_bytes <= budget:
        kernel = functools.partial(_fused_conv_gn_relu_kernel, p_true=P,
                                   p_pad=P_pad, tile_p=tile_p, n_tiles=T, eps=eps)
        out = pl.pallas_call(
            kernel,
            out_shape=jax.ShapeDtypeStruct((N, Cout, P_pad), jnp.float32),
            grid_spec=pltpu.PrefetchScalarGridSpec(
                num_scalar_prefetch=0,
                grid=(N, T),
                in_specs=[
                    pl.BlockSpec((1, K, tile_p), lambda n, t: (n, 0, t)),
                    pl.BlockSpec((Cout, K), lambda n, t: (0, 0)),
                    pl.BlockSpec((Cout, 1), lambda n, t: (0, 0)),
                    pl.BlockSpec((Cout, 1), lambda n, t: (0, 0)),
                    pl.BlockSpec((Cout, 1), lambda n, t: (0, 0)),
                ],
                out_specs=pl.BlockSpec((1, Cout, P_pad), lambda n, t: (n, 0, 0)),
            ),
            compiler_params=_cp(("parallel", "arbitrary")),
        )(patches, w_mat, b_col, g_col, bt_col)
        return out[:, :, :P].reshape(N, Cout, OH, OW)

    # ---- fallback two-pass path (per-sample slab too large for VMEM).
    kernel1 = functools.partial(_conv_bias_stats_kernel, p_true=P, tile_p=tile_p,
                                n_tiles=T)
    z, stats = pl.pallas_call(
        kernel1,
        out_shape=(
            jax.ShapeDtypeStruct((N, Cout, P_pad), compute_dtype),
            jax.ShapeDtypeStruct((N, T, 2, 128), jnp.float32),
        ),
        grid_spec=pltpu.PrefetchScalarGridSpec(
            num_scalar_prefetch=0,
            grid=(N, T),
            in_specs=[
                pl.BlockSpec((1, K, tile_p), lambda n, t: (n, 0, t)),
                pl.BlockSpec((Cout, K), lambda n, t: (0, 0)),
                pl.BlockSpec((Cout, 1), lambda n, t: (0, 0)),
            ],
            out_specs=[
                pl.BlockSpec((1, Cout, tile_p), lambda n, t: (n, 0, t)),
                pl.BlockSpec((1, 1, 2, 128), lambda n, t: (n, t, 0, 0)),
            ],
        ),
        compiler_params=_cp(("parallel", "parallel")),
    )(patches, w_mat, b_col)

    # ---- tiny per-sample finalize in f32: Chan's combine of the per-tile
    # (s1, M2) partials -> exact mean/var, folded with gamma/beta into (a, c).
    cnt_total = float(Cout * P)
    last_valid = P - (T - 1) * tile_p
    cnt_t = jnp.concatenate([
        jnp.full((T - 1,), float(Cout * tile_p), jnp.float32),
        jnp.full((1,), float(Cout * last_valid), jnp.float32)])
    s1 = stats[:, :, 0, 0]                                   # (N, T)
    m2 = stats[:, :, 1, 0]                                   # (N, T)
    mean = s1.sum(axis=1) / cnt_total                        # (N,)
    mean_t = s1 / cnt_t[None, :]
    var = (m2.sum(axis=1)
           + (cnt_t[None, :] * (mean_t - mean[:, None]) ** 2).sum(axis=1)) / cnt_total
    inv = lax.rsqrt(jnp.maximum(var, 0.0) + eps)
    g32 = gamma.astype(jnp.float32)[None, :]
    a = g32 * inv[:, None]                                   # (N, Cout)
    c = beta.astype(jnp.float32)[None, :] - mean[:, None] * a
    a = a.reshape(N, Cout, 1)
    c = c.reshape(N, Cout, 1)

    out = pl.pallas_call(
        _norm_relu_kernel,
        out_shape=jax.ShapeDtypeStruct((N, Cout, P_pad), jnp.float32),
        grid_spec=pltpu.PrefetchScalarGridSpec(
            num_scalar_prefetch=0,
            grid=(N, T),
            in_specs=[
                pl.BlockSpec((1, Cout, tile_p), lambda n, t: (n, 0, t)),
                pl.BlockSpec((1, Cout, 1), lambda n, t: (n, 0, 0)),
                pl.BlockSpec((1, Cout, 1), lambda n, t: (n, 0, 0)),
            ],
            out_specs=pl.BlockSpec((1, Cout, tile_p), lambda n, t: (n, 0, t)),
        ),
        compiler_params=_cp(("parallel", "parallel")),
    )(z, a, c)
    return out[:, :, :P].reshape(N, Cout, OH, OW)


def _reference(x, weight, bias, gamma, beta, *, stride, padding):
    """Plain-JAX reference matching PyTorch Conv2d + GroupNorm(1 group) + ReLU."""
    conv = lax.conv_general_dilated(
        x, weight, window_strides=(stride, stride),
        padding=[(padding, padding), (padding, padding)],
        dimension_numbers=("NCHW", "OIHW", "NCHW"),
        preferred_element_type=jnp.float32)
    conv = conv + bias.reshape(1, -1, 1, 1)
    n = conv.shape[0]
    flat = conv.reshape(n, -1)
    mean = flat.mean(axis=1).reshape(n, 1, 1, 1)
    var = ((flat - flat.mean(axis=1, keepdims=True)) ** 2).mean(axis=1).reshape(n, 1, 1, 1)
    y = (conv - mean) / jnp.sqrt(var + 1e-5)
    y = y * gamma.reshape(1, -1, 1, 1) + beta.reshape(1, -1, 1, 1)
    return jnp.maximum(y, 0.0)


if __name__ == "__main__":
    key = jax.random.PRNGKey(0)
    k1, k2, k3 = jax.random.split(key, 3)

    N, Cin, H, W = 2, 4, 16, 16
    Cout, ksize = 8, 3
    weight = jax.random.normal(k1, (Cout, Cin, ksize, ksize), jnp.float32) * 0.1
    bias = jax.random.normal(k2, (Cout,), jnp.float32) * 0.1
    gamma = jnp.ones((Cout,), jnp.float32)   # GroupNorm affine defaults
    beta = jnp.zeros((Cout,), jnp.float32)
    x = jax.random.normal(k3, (N, Cin, H, W), jnp.float32)

    configs = [
        # (stride, padding, compute_dtype, tile_p, force_two_pass, atol)
        (1, 1, jnp.float32, 128, False, 1e-4),    # fused, T=2 (dynamic slab stores)
        (1, 1, jnp.bfloat16, None, False, 2e-3),  # fused, bf16 MXU, auto tile size
        (2, 1, jnp.float32, None, False, 1e-4),   # fused, P=64 < 128: padded-lane mask
        (1, 0, jnp.float32, 128, False, 1e-4),    # fused, T=2 AND ragged last tile
        (1, 1, jnp.float32, 128, True, 1e-4),     # two-pass fallback, f32 z, T=2
        (1, 0, jnp.bfloat16, 128, True, 5e-3),    # two-pass fallback, bf16 z, ragged
    ]
    for stride, padding, dt, tp, force2, atol in configs:
        fn = jax.jit(functools.partial(
            conv_normalize_relu, stride=stride, padding=padding,
            compute_dtype=dt, tile_p=tp, force_two_pass=force2))
        out = jax.block_until_ready(fn(x, weight, bias, gamma, beta))

        ref = _reference(x.astype(dt), weight.astype(dt), bias, gamma, beta,
                         stride=stride, padding=padding)
        assert out.shape == ref.shape, (out.shape, ref.shape)
        err = float(jnp.max(jnp.abs(out - ref)))
        assert jnp.allclose(out, ref, atol=atol, rtol=atol), \
            f"config={(stride, padding, dt, tp, force2)} max abs err = {err}"

    print("KERNEL_OK")
</pallas_src>

<mosaic_0001>
module attributes {stable_mosaic.version = 11 : i64} {
  func.func @_fused_conv_gn_relu_kernel(%arg0: i32, %arg1: i32, %arg2: memref<1x36x128xf32, #tpu.memory_space<vmem>>, %arg3: memref<8x36xf32, #tpu.memory_space<vmem>>, %arg4: memref<8x1xf32, #tpu.memory_space<vmem>>, %arg5: memref<8x1xf32, #tpu.memory_space<vmem>>, %arg6: memref<8x1xf32, #tpu.memory_space<vmem>>, %arg7: memref<1x8x256xf32, #tpu.memory_space<vmem>>) attributes {dimension_semantics = [#tpu.dimension_semantics<parallel>, #tpu.dimension_semantics<arbitrary>], iteration_bounds = array<i64: 2, 2>, scalar_prefetch = 0 : i64, scratch_operands = 0 : i64, tpu.core_type = #tpu.core_type<tc>, window_params = [{transform_indices = @transform_0, window_bounds = array<i64: 1, 36, 128>}, {pipeline_mode = #tpu.pipeline_mode<synchronous>, transform_indices = @transform_1, window_bounds = array<i64: 8, 36>}, {pipeline_mode = #tpu.pipeline_mode<synchronous>, transform_indices = @transform_2, window_bounds = array<i64: 8, 1>}, {pipeline_mode = #tpu.pipeline_mode<synchronous>, transform_indices = @transform_3, window_bounds = array<i64: 8, 1>}, {pipeline_mode = #tpu.pipeline_mode<synchronous>, transform_indices = @transform_4, window_bounds = array<i64: 8, 1>}, {transform_indices = @transform_5, window_bounds = array<i64: 1, 8, 256>}]} {
    %c0 = arith.constant 0 : index
    %c0_0 = arith.constant 0 : index
    %0 = vector.load %arg3[%c0, %c0_0] : memref<8x36xf32, #tpu.memory_space<vmem>>, vector<8x36xf32>
    %c0_1 = arith.constant 0 : index
    %c0_2 = arith.constant 0 : index
    %c0_3 = arith.constant 0 : index
    %1 = vector.load %arg2[%c0_1, %c0_2, %c0_3] : memref<1x36x128xf32, #tpu.memory_space<vmem>>, vector<1x36x128xf32>
    %2 = vector.shape_cast %1 : vector<1x36x128xf32> to vector<36x128xf32>
    %cst = arith.constant dense<0.000000e+00> : vector<8x128xf32>
    %3 = tpu.matmul %0, %2, %cst {dimension_numbers = #tpu.dot_dimension_numbers<[1], [0], [0], [1], [0, 0, 1, 1], [], []>} : vector<8x36xf32>, vector<36x128xf32>, vector<8x128xf32> -> vector<8x128xf32>
    %c0_4 = arith.constant 0 : index
    %c0_5 = arith.constant 0 : index
    %4 = vector.load %arg4[%c0_4, %c0_5] : memref<8x1xf32, #tpu.memory_space<vmem>>, vector<8x1xf32>
    %5 = vector.broadcast %4 : vector<8x1xf32> to vector<8x128xf32>
    %6 = arith.addf %3, %5 : vector<8x128xf32>
    %c128_i32 = arith.constant 128 : i32
    %7 = arith.muli %arg1, %c128_i32 : i32
    %8 = tpu.assume_multiple %7, 128 : i32
    %c0_6 = arith.constant 0 : index
    %c0_7 = arith.constant 0 : index
    %9 = arith.index_cast %8 : i32 to index
    %10 = vector.load %arg7[%c0_6, %c0_7, %9] : memref<1x8x256xf32, #tpu.memory_space<vmem>>, vector<1x8x128xf32>
    %11 = vector.shape_cast %10 : vector<1x8x128xf32> to vector<8x128xf32>
    %12 = vector.shape_cast %6 : vector<8x128xf32> to vector<1x8x128xf32>
    tpu.vector_store %arg7[%c0_6, %c0_7, %9], %12 {strides = array<i32>} : memref<1x8x256xf32, #tpu.memory_space<vmem>>, vector<1x8x128xf32>,
    %c1_i32 = arith.constant 1 : i32
    %13 = arith.cmpi eq, %arg1, %c1_i32 : i32
    %14 = arith.extui %13 : i1 to i32
    %c0_i32 = arith.constant 0 : i32
    %15 = arith.cmpi ne, %14, %c0_i32 : i32
    scf.if %15 {
      %c0_8 = arith.constant 0 : index
      %c0_9 = arith.constant 0 : index
      %c0_10 = arith.constant 0 : index
      %16 = vector.load %arg7[%c0_8, %c0_9, %c0_10] : memref<1x8x256xf32, #tpu.memory_space<vmem>>, vector<1x8x256xf32>
      %17 = vector.shape_cast %16 : vector<1x8x256xf32> to vector<8x256xf32>
      %18 = vector.shape_cast %17 : vector<8x256xf32> to vector<1x8x256xf32>
      %cst_11 = arith.constant dense<0.000000e+00> : vector<1xf32>
      %19 = vector.multi_reduction <add>, %18, %cst_11 [1, 2] : vector<1x8x256xf32> to vector<1xf32>
      %20 = vector.shape_cast %19 : vector<1xf32> to vector<1x1x1xf32>
      %21 = vector.extract %20[0, 0, 0] : f32 from vector<1x1x1xf32>
      %22 = vector.broadcast %21 : f32 to vector<1x1xf32>
      %cst_12 = arith.constant 2.048000e+03 : f32
      %23 = vector.broadcast %cst_12 : f32 to vector<1x1xf32>
      %24 = arith.divf %22, %23 : vector<1x1xf32>
      %25 = vector.broadcast %24 : vector<1x1xf32> to vector<8x256xf32>
      %26 = arith.subf %17, %25 : vector<8x256xf32>
      %27 = arith.mulf %26, %26 : vector<8x256xf32>
      %28 = vector.shape_cast %27 : vector<8x256xf32> to vector<1x8x256xf32>
      %cst_13 = arith.constant dense<0.000000e+00> : vector<1xf32>
      %29 = vector.multi_reduction <add>, %28, %cst_13 [1, 2] : vector<1x8x256xf32> to vector<1xf32>
      %30 = vector.shape_cast %29 : vector<1xf32> to vector<1x1x1xf32>
      %31 = vector.extract %30[0, 0, 0] : f32 from vector<1x1x1xf32>
      %32 = vector.broadcast %31 : f32 to vector<1x1xf32>
      %cst_14 = arith.constant 2.048000e+03 : f32
      %33 = vector.broadcast %cst_14 : f32 to vector<1x1xf32>
      %34 = arith.divf %32, %33 : vector<1x1xf32>
      %c0_15 = arith.constant 0 : index
      %c0_16 = arith.constant 0 : index
      %35 = vector.load %arg5[%c0_15, %c0_16] : memref<8x1xf32, #tpu.memory_space<vmem>>, vector<8x1xf32>
      %cst_17 = arith.constant 9.99999974E-6 : f32
      %36 = vector.broadcast %cst_17 : f32 to vector<1x1xf32>
      %37 = arith.addf %34, %36 : vector<1x1xf32>
      %38 = math.rsqrt %37 : vector<1x1xf32>
      %39 = vector.broadcast %38 : vector<1x1xf32> to vector<8x1xf32>
      %40 = arith.mulf %35, %39 : vector<8x1xf32>
      %c0_18 = arith.constant 0 : index
      %c0_19 = arith.constant 0 : index
      %41 = vector.load %arg6[%c0_18, %c0_19] : memref<8x1xf32, #tpu.memory_space<vmem>>, vector<8x1xf32>
      %42 = vector.broadcast %24 : vector<1x1xf32> to vector<8x1xf32>
      %43 = arith.mulf %42, %40 : vector<8x1xf32>
      %44 = arith.subf %41, %43 : vector<8x1xf32>
      %45 = vector.broadcast %40 : vector<8x1xf32> to vector<8x256xf32>
      %46 = arith.mulf %17, %45 : vector<8x256xf32>
      %47 = vector.broadcast %44 : vector<8x1xf32> to vector<8x256xf32>
      %48 = arith.addf %46, %47 : vector<8x256xf32>
      %cst_20 = arith.constant 0.000000e+00 : f32
      %49 = vector.broadcast %cst_20 : f32 to vector<8x256xf32>
      %50 = arith.maximumf %48, %49 : vector<8x256xf32>
      %c0_21 = arith.constant 0 : index
      %c0_22 = arith.constant 0 : index
      %c0_23 = arith.constant 0 : index
      %51 = vector.load %arg7[%c0_21, %c0_22, %c0_23] : memref<1x8x256xf32, #tpu.memory_space<vmem>>, vector<1x8x256xf32>
      %52 = vector.shape_cast %51 : vector<1x8x256xf32> to vector<8x256xf32>
      %53 = vector.shape_cast %50 : vector<8x256xf32> to vector<1x8x256xf32>
      tpu.vector_store %arg7[%c0_21, %c0_22, %c0_23], %53 {strides = array<i32>} : memref<1x8x256xf32, #tpu.memory_space<vmem>>, vector<1x8x256xf32>,
    } else {
    }
    return
  }
  func.func @transform_0(%arg0: i32, %arg1: i32) -> (i32, i32, i32) {
    %c0_i32 = arith.constant 0 : i32
    %c0_i32_0 = arith.constant 0 : i32
    return %arg0, %c0_i32, %arg1 : i32, i32, i32
  }
  func.func @transform_1(%arg0: i32, %arg1: i32) -> (i32, i32) {
    %c0_i32 = arith.constant 0 : i32
    %c0_i32_0 = arith.constant 0 : i32
    %c0_i32_1 = arith.constant 0 : i32
    return %c0_i32, %c0_i32_0 : i32, i32
  }
  func.func @transform_2(%arg0: i32, %arg1: i32) -> (i32, i32) {
    %c0_i32 = arith.constant 0 : i32
    %c0_i32_0 = arith.constant 0 : i32
    %c0_i32_1 = arith.constant 0 : i32
    return %c0_i32, %c0_i32_0 : i32, i32
  }
  func.func @transform_3(%arg0: i32, %arg1: i32) -> (i32, i32) {
    %c0_i32 = arith.constant 0 : i32
    %c0_i32_0 = arith.constant 0 : i32
    %c0_i32_1 = arith.constant 0 : i32
    return %c0_i32, %c0_i32_0 : i32, i32
  }
  func.func @transform_4(%arg0: i32, %arg1: i32) -> (i32, i32) {
    %c0_i32 = arith.constant 0 : i32
    %c0_i32_0 = arith.constant 0 : i32
    %c0_i32_1 = arith.constant 0 : i32
    return %c0_i32, %c0_i32_0 : i32, i32
  }
  func.func @transform_5(%arg0: i32, %arg1: i32) -> (i32, i32, i32) {
    %c0_i32 = arith.constant 0 : i32
    %c0_i32_0 = arith.constant 0 : i32
    %c0_i32_1 = arith.constant 0 : i32
    return %arg0, %c0_i32, %c0_i32_0 : i32, i32, i32
  }
}

</mosaic_0001>

<llo_original>
// kernel: conv_normalize_relu.1
$region0: #{conv_normalize_relu.1}
  #allocation0 [shape = 'u32[]', space=smem, size = 0x4, offset = 0x4, fixed_abs, tag = 'smem constant byte address 0x4 - core index']
  #allocation1 [shape = 'u32[144,128]{1,0:T(1,128)}', space=vmem, size = 0x12000, scoped, tag = 'internal scratch']
  %s0 = inlined_call_operand.vmem [shape: f32[2,36,256], index: 0, kind: input, shape index: {}]
  %s1 = inlined_call_operand.vmem [shape: f32[8,36], index: 1, kind: input, shape index: {}]
  %s2 = inlined_call_operand.vmem [shape: f32[8,1], index: 2, kind: input, shape index: {}]
  %s3 = inlined_call_operand.vmem [shape: f32[8,1], index: 3, kind: input, shape index: {}]
  %s4 = inlined_call_operand.vmem [shape: f32[8,1], index: 4, kind: input, shape index: {}]
  %s5 = inlined_call_operand.vmem [shape: f32[2,8,256], index: 5, kind: output, shape index: {}]
  %s6 = sld [smem:[#allocation0]]
  $region95: #{conv_normalize_relu.1} parent=0
    _
  %s8 = ssub.s32 1, %s6
  %s9 = scalar_select 0, %s8, %s6
  $region1: #{conv_normalize_relu.1} parent=0
    #allocation2 [shape = 'u8[40960]{0}', space=vmem, size = 0xa000, scoped, tag = 'input window, operand 0']
    loop: start=0, step=1, limit=6
    $region2: #{conv_normalize_relu.1} parent=1 // loop_pre_header
      _
    $region3: #{conv_normalize_relu.1} parent=1 // loop_header
      %s11 = sphi 0, %s15
      %p12 = scmp.ge.s32.totalorder %s11, 6
      %s18 = sphi 0, %s30
      %s19 = sphi 0, %s26
      %s20 = sphi 0, %s18
      %s21 = sphi 0, %s19
      %s22 = sphi 0, %s20
      %s23 = sphi 0, %s21
      %s35 = sphi 0, %s37
      %s38 = sphi 0, %s35
      %s39 = sphi 0, %s38
      %s55 = sphi 0, %s39
      %s59 = sphi 0, %s59
      %s61 = sphi 0, %s59
      %s62 = sphi 0, %s61
      %s76 = sphi 0, %s62
      %s80 = sphi 0, %s80
      %s82 = sphi 0, %s80
      %s83 = sphi 0, %s82
      %s97 = sphi 0, %s83
      %s101 = sphi 0, %s101
      %s103 = sphi 0, %s101
      %s104 = sphi 0, %s103
      %s118 = sphi 0, %s104
      %s122 = sphi 0, %s122
      %s124 = sphi 0, %s122
      %s125 = sphi 0, %s124
      %s139 = sphi 0, %s125
      %s145 = sphi 0, %s147
      %s148 = sphi 0, %s145
      %s149 = sphi 0, %s148
      %s165 = sphi 0, %s149
    $region4: #{conv_normalize_relu.1} parent=1 // loop_header_branch
      %14 = sbr.rel (%p12) target = $region8
    $region5: #{conv_normalize_relu.1} parent=1 // loop_body
      %s16 = ssub.s32 %s11, 1
      %s17 = ssub.s32 %s11, 2
      %s24 = sadd.s32 1, %s19
      %p25 = scmp.ge.s32.totalorder %s24, 2
      %s26 = scalar_select %p25, 0, %s24
      %s27 = sadd.s32 1, %s18
      %s28 = scalar_select %p25, %s27, %s18
      %p29 = scmp.ge.s32.totalorder %s28, 2
      %s30 = scalar_select %p29, 0, %s28
      %s31 = ssub.s32 %s18, %s30
      %s32 = ssub.s32 %s19, %s26
      %s33 = sor.u32 %s31, %s32
      %p34 = scmp.eq.s32.totalorder %s33, 0
      %s36 = sadd.s32 %s35, 1
      %s37 = scalar_select %p34, %s35, %s36
      %p40 = pneg %p34
      %p41 = scmp.eq.s32.totalorder %s11, 3
      %p42 = por %p40, %p41
      %p43 = scmp.ne.s32.totalorder %s35, %s38
      %p44 = scmp.eq.s32.totalorder %s11, 0
      %p45 = por %p43, %p44
      %p46 = scmp.ne.s32.totalorder %s35, %s38
      %p47 = scmp.eq.s32.totalorder %s16, 3
      %p48 = por %p46, %p47
      %p49 = scmp.ne.s32.totalorder %s38, %s39
      %p50 = scmp.eq.s32.totalorder %s16, 0
      %p51 = por %p49, %p50
      %p52 = scmp.ne.s32.totalorder %s38, %s39
      %p53 = scmp.eq.s32.totalorder %s17, 3
      %p54 = por %p52, %p53
      %p56 = scmp.ne.s32.totalorder %s39, %s55
      %p57 = scmp.eq.s32.totalorder %s17, 0
      %p58 = por %p56, %p57
      %s60 = sadd.s32 %s59, 1
      %p63 = scmp.eq.s32.totalorder %s11, 3
      %p64 = scmp.ne.s32.totalorder %s59, %s61
      %p65 = scmp.eq.s32.totalorder %s11, 0
      %p66 = por %p64, %p65
      %p67 = scmp.ne.s32.totalorder %s59, %s61
      %p68 = scmp.eq.s32.totalorder %s16, 3
      %p69 = por %p67, %p68
      %p70 = scmp.ne.s32.totalorder %s61, %s62
      %p71 = scmp.eq.s32.totalorder %s16, 0
      %p72 = por %p70, %p71
      %p73 = scmp.ne.s32.totalorder %s61, %s62
      %p74 = scmp.eq.s32.totalorder %s17, 3
      %p75 = por %p73, %p74
      %p77 = scmp.ne.s32.totalorder %s62, %s76
      %p78 = scmp.eq.s32.totalorder %s17, 0
      %p79 = por %p77, %p78
      %s81 = sadd.s32 %s80, 1
      %p84 = scmp.eq.s32.totalorder %s11, 3
      %p85 = scmp.ne.s32.totalorder %s80, %s82
      %p86 = scmp.eq.s32.totalorder %s11, 0
      %p87 = por %p85, %p86
      %p88 = scmp.ne.s32.totalorder %s80, %s82
      %p89 = scmp.eq.s32.totalorder %s16, 3
      %p90 = por %p88, %p89
      %p91 = scmp.ne.s32.totalorder %s82, %s83
      %p92 = scmp.eq.s32.totalorder %s16, 0
      %p93 = por %p91, %p92
      %p94 = scmp.ne.s32.totalorder %s82, %s83
      %p95 = scmp.eq.s32.totalorder %s17, 3
      %p96 = por %p94, %p95
      %p98 = scmp.ne.s32.totalorder %s83, %s97
      %p99 = scmp.eq.s32.totalorder %s17, 0
      %p100 = por %p98, %p99
      %s102 = sadd.s32 %s101, 1
      %p105 = scmp.eq.s32.totalorder %s11, 3
      %p106 = scmp.ne.s32.totalorder %s101, %s103
      %p107 = scmp.eq.s32.totalorder %s11, 0
      %p108 = por %p106, %p107
      %p109 = scmp.ne.s32.totalorder %s101, %s103
      %p110 = scmp.eq.s32.totalorder %s16, 3
      %p111 = por %p109, %p110
      %p112 = scmp.ne.s32.totalorder %s103, %s104
      %p113 = scmp.eq.s32.totalorder %s16, 0
      %p114 = por %p112, %p113
      %p115 = scmp.ne.s32.totalorder %s103, %s104
      %p116 = scmp.eq.s32.totalorder %s17, 3
      %p117 = por %p115, %p116
      %p119 = scmp.ne.s32.totalorder %s104, %s118
      %p120 = scmp.eq.s32.totalorder %s17, 0
      %p121 = por %p119, %p120
      %s123 = sadd.s32 %s122, 1
      %p126 = scmp.eq.s32.totalorder %s11, 3
      %p127 = scmp.ne.s32.totalorder %s122, %s124
      %p128 = scmp.eq.s32.totalorder %s11, 0
      %p129 = por %p127, %p128
      %p130 = scmp.ne.s32.totalorder %s122, %s124
      %p131 = scmp.eq.s32.totalorder %s16, 3
      %p132 = por %p130, %p131
      %p133 = scmp.ne.s32.totalorder %s124, %s125
      %p134 = scmp.eq.s32.totalorder %s16, 0
      %p135 = por %p133, %p134
      %p136 = scmp.ne.s32.totalorder %s124, %s125
      %p137 = scmp.eq.s32.totalorder %s17, 3
      %p138 = por %p136, %p137
      %p140 = scmp.ne.s32.totalorder %s125, %s139
      %p141 = scmp.eq.s32.totalorder %s17, 0
      %p142 = por %p140, %p141
      %s143 = ssub.s32 %s18, %s30
      %p144 = scmp.eq.s32.totalorder %s143, 0
      %s146 = sadd.s32 %s145, 1
      %s147 = scalar_select %p144, %s145, %s146
      %p150 = pneg %p144
      %p151 = scmp.eq.s32.totalorder %s11, 3
      %p152 = por %p150, %p151
      %p153 = scmp.ne.s32.totalorder %s145, %s148
      %p154 = scmp.eq.s32.totalorder %s11, 0
      %p155 = por %p153, %p154
      %p156 = scmp.ne.s32.totalorder %s145, %s148
      %p157 = scmp.eq.s32.totalorder %s16, 3
      %p158 = por %p156, %p157
      %p159 = scmp.ne.s32.totalorder %s148, %s149
      %p160 = scmp.eq.s32.totalorder %s16, 0
      %p161 = por %p159, %p160
      %p162 = scmp.ne.s32.totalorder %s148, %s149
      %p163 = scmp.eq.s32.totalorder %s17, 3
      %p164 = por %p162, %p163
      %p166 = scmp.ne.s32.totalorder %s149, %s165
      %p167 = scmp.eq.s32.totalorder %s17, 0
      %p168 = por %p166, %p167
      %p169 = scmp.le.s32.totalorder 1, %s11
      %p170 = scmp.lt.s32.totalorder %s11, 5
      %p171 = pnand %p169, %p170
      %p172 = pneg %p171
      // Predicated region
      $region9: #{conv_normalize_relu.1} parent=5 // pred_check
        _
      $region10: #{conv_normalize_relu.1} parent=5 // pred_check_branch
        %174 = sbr.rel (%p171) target = $region12
      $region11: #{conv_normalize_relu.1} parent=5 // pred_region
        %s175 = ssub.s32 %s11, 1
        // Predicated region
        $region13: #{conv_normalize_relu.1} parent=11 // pred_check
          %p176 = pneg %p72
        $region14: #{conv_normalize_relu.1} parent=11 // pred_check_branch
          %178 = sbr.rel (%p176) target = $region16
        $region15: #{conv_normalize_relu.1} parent=11 // pred_region
          _
        $region16: #{conv_normalize_relu.1} parent=11 // pred_fallthru
          _
        // Predicated region
        $region17: #{conv_normalize_relu.1} parent=11 // pred_check
          %p179 = pneg %p93
        $region18: #{conv_normalize_relu.1} parent=11 // pred_check_branch
          %181 = sbr.rel (%p179) target = $region20
        $region19: #{conv_normalize_relu.1} parent=11 // pred_region
          _
        $region20: #{conv_normalize_relu.1} parent=11 // pred_fallthru
          _
        // Predicated region
        $region21: #{conv_normalize_relu.1} parent=11 // pred_check
          %p182 = pneg %p114
        $region22: #{conv_normalize_relu.1} parent=11 // pred_check_branch
          %184 = sbr.rel (%p182) target = $region24
        $region23: #{conv_normalize_relu.1} parent=11 // pred_region
          _
        $region24: #{conv_normalize_relu.1} parent=11 // pred_fallthru
          _
        // Predicated region
        $region25: #{conv_normalize_relu.1} parent=11 // pred_check
          %p185 = pneg %p135
        $region26: #{conv_normalize_relu.1} parent=11 // pred_check_branch
          %187 = sbr.rel (%p185) target = $region28
        $region27: #{conv_normalize_relu.1} parent=11 // pred_region
          _
        $region28: #{conv_normalize_relu.1} parent=11 // pred_fallthru
          _
      $region12: #{conv_normalize_relu.1} parent=5 // pred_fallthru
        _
      %p188 = scmp.lt.s32.totalorder %s11, 4
      // Predicated region
      $region29: #{conv_normalize_relu.1} parent=5 // pred_check
        %p189 = pneg %p188
      $region30: #{conv_normalize_relu.1} parent=5 // pred_check_branch
        %191 = sbr.rel (%p189) target = $region32
      $region31: #{conv_normalize_relu.1} parent=5 // pred_region
        // Predicated region
        $region33: #{conv_normalize_relu.1} parent=31 // pred_check
          %p192 = pneg %p45
        $region34: #{conv_normalize_relu.1} parent=31 // pred_check_branch
          %194 = sbr.rel (%p192) target = $region36
        $region35: #{conv_normalize_relu.1} parent=31 // pred_region
          %s195 = sand.u32 %s35, 1
          %s196 = sand.u32 %s35, 1
          %s197 = smul.addr %s196, 40
          %s198 = scalar_lea.vmem [#allocation2], %s197
          %s199 = smul.addr %s18, 10
          %s200 = sadd.s32 %s19, %s199
          %s201 = smul.addr %s200, 8
          %s202 = scalar_lea.vmem %s0, %s201
          // Predicated region
          $region37: #{conv_normalize_relu.1} parent=35 // pred_check
            _
          $region38: #{conv_normalize_relu.1} parent=35 // pred_check_branch
            %204 = sbr.rel (0) target = $region40
          $region39: #{conv_normalize_relu.1} parent=35 // pred_region
            // Predicated region
            $region41: #{conv_normalize_relu.1} parent=39 // pred_check
              _
            $region42: #{conv_normalize_relu.1} parent=39 // pred_check_branch
              %206 = sbr.rel (0) target = $region44
            $region43: #{conv_normalize_relu.1} parent=39 // pred_region
              // Predicated region
              $region56: #{conv_normalize_relu.1} parent=43 // pred_check
                _
              $region57: #{conv_normalize_relu.1} parent=43 // pred_check_branch
                %230 = sbr.rel (0) target = $region59
              $region58: #{conv_normalize_relu.1} parent=43 // pred_region
                loop: start=0, step=1, limit=1
                $region60: #{conv_normalize_relu.1} parent=58 // loop_pre_header
                  _
                $region61: #{conv_normalize_relu.1} parent=58 // loop_header
                  %s232 = sphi 0, %s236
                  %p233 = scmp.ge.s32.totalorder %s232, 1
                  %s237 = sphi %s202, %s202
                  %s238 = sphi %s198, %s198
                $region62: #{conv_normalize_relu.1} parent=58 // loop_header_branch
                  %235 = sbr.rel (%p233) target = $region66
                $region63: #{conv_normalize_relu.1} parent=58 // loop_body
                  %v239 = vld [vmem:[%s237] sm:$0xff]
                  %240 = vst [vmem:[%s238] sm:$0xff] %v239
                  %v241 = vld [vmem:[%s237 + $0x10] sm:$0xff]
                  %242 = vst [vmem:[%s238 + $0x8] sm:$0xff] %v241
                  %v243 = vld [vmem:[%s237 + $0x20] sm:$0xff]
                  %244 = vst [vmem:[%s238 + $0x10] sm:$0xff] %v243
                  %v245 = vld [vmem:[%s237 + $0x30] sm:$0xff]
                  %246 = vst [vmem:[%s238 + $0x18] sm:$0xff] %v245
                  %v247 = vld [vmem:[%s237 + $0x40] sm:$0xff]
                  %248 = vst [vmem:[%s238 + $0x20] sm:$0xff] %v247
                $region64: #{conv_normalize_relu.1} parent=58 // loop_footer
                  %s236 = sadd.s32 1, %s232
                $region65: #{conv_normalize_relu.1} parent=58 // loop_footer_branch
                  %231 = sbr.rel target = $region61
                $region66: #{conv_normalize_relu.1} parent=58 // loop_exit
                  _
              $region59: #{conv_normalize_relu.1} parent=43 // pred_fallthru
                _
              // Predicated region
              $region67: #{conv_normalize_relu.1} parent=43 // pred_check
                _
              $region68: #{conv_normalize_relu.1} parent=43 // pred_check_branch
                %250 = sbr.rel target = $region70
              $region69: #{conv_normalize_relu.1} parent=43 // pred_region
                _
              $region70: #{conv_normalize_relu.1} parent=43 // pred_fallthru
                _
            $region44: #{conv_normalize_relu.1} parent=39 // pred_fallthru
              _
            // Predicated region
            $region45: #{conv_normalize_relu.1} parent=39 // pred_check
              _
            $region46: #{conv_normalize_relu.1} parent=39 // pred_check_branch
              %208 = sbr.rel target = $region48
            $region47: #{conv_normalize_relu.1} parent=39 // pred_region
              %s210 = ssub.s32 256, 1
              loop: start=0, step=1, limit=1
              $region49: #{conv_normalize_relu.1} parent=47 // loop_pre_header
                _
              $region50: #{conv_normalize_relu.1} parent=47 // loop_header
                %s212 = sphi 0, %s216
                %p213 = scmp.ge.s32.totalorder %s212, 1
                %s217 = sphi %s202, %s202
                %s218 = sphi %s198, %s198
              $region51: #{conv_normalize_relu.1} parent=47 // loop_header_branch
                %215 = sbr.rel (%p213) target = $region55
              $region52: #{conv_normalize_relu.1} parent=47 // loop_body
                %v219 = vld [vmem:[%s217] sm:%s210]
                %220 = vst [vmem:[%s218] sm:%s210] %v219
                %v221 = vld [vmem:[%s217 + $0x10] sm:%s210]
                %222 = vst [vmem:[%s218 + $0x8] sm:%s210] %v221
                %v223 = vld [vmem:[%s217 + $0x20] sm:%s210]
                %224 = vst [vmem:[%s218 + $0x10] sm:%s210] %v223
                %v225 = vld [vmem:[%s217 + $0x30] sm:%s210]
                %226 = vst [vmem:[%s218 + $0x18] sm:%s210] %v225
                %v227 = vld [vmem:[%s217 + $0x40] sm:%s210]
                %228 = vst [vmem:[%s218 + $0x20] sm:%s210] %v227
              $region53: #{conv_normalize_relu.1} parent=47 // loop_footer
                %s216 = sadd.s32 1, %s212
              $region54: #{conv_normalize_relu.1} parent=47 // loop_footer_branch
                %211 = sbr.rel target = $region50
              $region55: #{conv_normalize_relu.1} parent=47 // loop_exit
                _
            $region48: #{conv_normalize_relu.1} parent=39 // pred_fallthru
              _
          $region40: #{conv_normalize_relu.1} parent=35 // pred_fallthru
            _
          %251 = vnop
        $region36: #{conv_normalize_relu.1} parent=31 // pred_fallthru
          _
      $region32: #{conv_normalize_relu.1} parent=5 // pred_fallthru
        _
      %p252 = scmp.le.s32.totalorder 1, %s11
      %p253 = scmp.lt.s32.totalorder %s11, 5
      %p254 = pnand %p252, %p253
      %p255 = pneg %p254
      // Predicated region
      $region71: #{conv_normalize_relu.1} parent=5 // pred_check
        _
      $region72: #{conv_normalize_relu.1} parent=5 // pred_check_branch
        %257 = sbr.rel (%p254) target = $region74
      $region73: #{conv_normalize_relu.1} parent=5 // pred_region
        %s258 = ssub.s32 %s11, 1
        %s259 = sand.u32 %s38, 1
        %s260 = sand.u32 %s38, 1
        %s261 = smul.addr %s260, 40
        %s262 = scalar_lea.vmem [#allocation2], %s261
        // Predicated region
        $region75: #{conv_normalize_relu.1} parent=73 // pred_check
          %p263 = pneg %p51
        $region76: #{conv_normalize_relu.1} parent=73 // pred_check_branch
          %265 = sbr.rel (%p263) target = $region78
        $region77: #{conv_normalize_relu.1} parent=73 // pred_region
          _
        $region78: #{conv_normalize_relu.1} parent=73 // pred_fallthru
          _
        %s266 = sand.u32 %s38, 1
        %s267 = sand.u32 %s38, 1
        %s268 = smul.addr %s267, 40
        %s269 = scalar_lea.vmem [#allocation2], %s268
        %p270 = pneg %p51
        %p271 = pneg %p48
        %p272 = pneg %p72
        %p273 = pneg %p69
        %p274 = pneg %p93
        %p275 = pneg %p90
        %p276 = pneg %p114
        %p277 = pneg %p111
        %p278 = pneg %p135
        %p279 = pneg %p132
        %p280 = pneg %p161
        %p281 = pneg %p158
        %p282 = scmp.lt.s32.totalorder %s20, 1
        %s283 = scalar_select %p282, %s20, 1
        %s284 = smul.addr %s283, 2
        %s285 = smul.addr %s284, 8
        %s286 = scalar_lea.vmem %s5, %s285
        %p287 = scmp.lt.s32.totalorder %s20, 1
        %s288 = scalar_select %p287, %s20, 1
        %s289 = smul.addr %s288, 2
        %s290 = smul.addr %s289, 8
        %s291 = scalar_lea.vmem %s5, %s290
        %v292 = vld [vmem:[%s1] sm:$0xff]
        %v293 = vld [vmem:[%s262] sm:$0xff]
        %v294 = vld [vmem:[%s262 + $0x8] sm:$0xff]
        %v295 = vld [vmem:[%s262 + $0x10] sm:$0xff]
        %v296 = vld [vmem:[%s262 + $0x18] sm:$0xff]
        %v297 = vld [vmem:[%s262 + $0x20] sm:$0xf]
        %v298 = vld [vmem:[%s2] sm:$0xff]
        %300 = vset.pattern.permute.xlu0 0
        %301 = vperm.xlu0 %300, %v298
        %v302 = vpop.permute.xlu0 %301
        %vm304 = vcmask 293888
        %v306 = vsel %vm304, %v292, 0
        %vm308 = vcmask 1043456
        %v310 = vsel %vm308, %v297, 0
        %312 = vmatprep.subr.mxu0 0.0
        %313 = vmatpush1.msra.mxu0 0.0
        %314 = vmatprep.subr.mxu0 0.0
        %315 = vmatpush1.msra.mxu0 0.0
        %316 = vmatprep.subr.mxu0 0.0
        %317 = vmatpush1.msra.mxu0 0.0
        %318 = vmatprep.subr.mxu0 0.0
        %319 = vmatpush1.msra.mxu0 0.0
        %320 = vmatprep.subr.mxu0 0.0
        %321 = vmatpush1.msra.mxu0 0.0
        %322 = vmatprep.subr.mxu0 0.0
        %323 = vmatpush1.msra.mxu0 0.0
        %324 = vmatprep.subr.mxu0 0.0
        %325 = vmatpush1.msra.mxu0 0.0
        %326 = vmatprep.subr.mxu0 0.0
        %327 = vmatpush1.msra.mxu0 0.0
        %328 = vmatprep.subr.mxu0 0.0
        %329 = vmatpush1.msra.mxu0 0.0
        %330 = vmatprep.subr.mxu0 0.0
        %331 = vmatpush1.msra.mxu0 0.0
        %332 = vmatprep.subr.mxu0 0.0
        %333 = vmatpush1.msra.mxu0 0.0
        %334 = vmatprep.subr.mxu0 0.0
        %335 = vmatpush1.msra.mxu0 %v310
        %336 = vmatprep.subr.mxu0 0.0
        %337 = vmatpush1.msra.mxu0 %v296
        %338 = vmatprep.subr.mxu0 0.0
        %339 = vmatpush1.msra.mxu0 %v295
        %340 = vmatprep.subr.mxu0 0.0
        %341 = vmatpush1.msra.mxu0 %v294
        %342 = vmatprep.subr.mxu0 0.0
        %343 = vmatpush1.msra.mxu0 %v293
        %344 = vmatprep.subr.mxu0 0.0
        %345 = vmatpush2.msra.mxu0 0.0
        %346 = vmatprep.subr.mxu0 0.0
        %347 = vmatpush2.msra.mxu0 0.0
        %348 = vmatprep.subr.mxu0 0.0
        %349 = vmatpush2.msra.mxu0 0.0
        %350 = vmatprep.subr.mxu0 0.0
        %351 = vmatpush2.msra.mxu0 0.0
        %352 = vmatprep.subr.mxu0 0.0
        %353 = vmatpush2.msra.mxu0 0.0
        %354 = vmatprep.subr.mxu0 0.0
        %355 = vmatpush2.msra.mxu0 0.0
        %356 = vmatprep.subr.mxu0 0.0
        %357 = vmatpush2.msra.mxu0 0.0
        %358 = vmatprep.subr.mxu0 0.0
        %359 = vmatpush2.msra.mxu0 0.0
        %360 = vmatprep.subr.mxu0 0.0
        %361 = vmatpush2.msra.mxu0 0.0
        %362 = vmatprep.subr.mxu0 0.0
        %363 = vmatpush2.msra.mxu0 0.0
        %364 = vmatprep.subr.mxu0 0.0
        %365 = vmatpush2.msra.mxu0 0.0
        %366 = vmatprep.subr.mxu0 0.0
        %367 = vmatpush2.msra.mxu0 0.0
        %368 = vmatprep.subr.mxu0 0.0
        %369 = vmatpush2.msra.mxu0 0.0
        %370 = vmatprep.subr.mxu0 0.0
        %371 = vmatpush2.msra.mxu0 0.0
        %372 = vmatprep.subr.mxu0 0.0
        %373 = vmatpush2.msra.mxu0 0.0
        %374 = vmatprep.subr.mxu0 0.0
        %375 = vmatpush2.msra.mxu0 0.0
        %376 = vmatprep.mubr.f32.mxu0 0.0
        %377 = vmatmul.mubr.f32.gmra.mxu0 %v306
        %v378 = vpop.f32.mrf.mxu0
        %v379 = vadd.f32 %v302, %v378
        %v380 = vpop.f32.mrf.mxu0
        %381 = vdwg.mxu0
        %s382 = smul.u32 %s21, 128
        %s383 = sshra.s32 %s382, 7
        %s384 = sand.u32 %s382, 127
        %s385 = smul.addr %s383, 8
        %s386 = scalar_lea.vmem %s291, %s385
        %387 = vst [vmem:[%s386] sm:$0xff] %v379
        %p388 = scmp.eq.s32.totalorder %s21, 1
        // Predicated region
        $region79: #{conv_normalize_relu.1} parent=73 // pred_check
          %p389 = pneg %p388
        $region80: #{conv_normalize_relu.1} parent=73 // pred_check_branch
          %391 = sbr.rel (%p389) target = $region82
        $region81: #{conv_normalize_relu.1} parent=73 // pred_region
          %v392 = vld [vmem:[%s291] sm:$0xff]
          %v393 = vld [vmem:[%s291 + $0x8] sm:$0xff]
          %v394 = vadd.f32 %v392, %v393
          %395 = vadd.xlane.f32.xlu0 %v394
          %v396 = vpop.xlane.xlu0 %395
          %v397 = vrot.slane %v396, 4
          %v398 = vadd.f32 %v396, %v397
          %v399 = vrot.slane %v398, 2
          %v400 = vadd.f32 %v398, %v399
          %v401 = vrot.slane %v400, 1
          %v402 = vadd.f32 %v400, %v401
          %s403 = vtos %v402
          %v404 = vstv %s403
          %v405 = vrcp.pop 2048.0
          %v406 = vmul.f32 %v404, %v405
          %v407 = vsub.f32 %v392, %v406
          %v408 = vsub.f32 %v393, %v406
          %v409 = vmul.f32 %v407, %v407
          %v410 = vmul.f32 %v408, %v408
          %v411 = vadd.f32 %v409, %v410
          %412 = vadd.xlane.f32.xlu0 %v411
          %v413 = vpop.xlane.xlu0 %412
          %v414 = vrot.slane %v413, 4
          %v415 = vadd.f32 %v413, %v414
          %v416 = vrot.slane %v415, 2
          %v417 = vadd.f32 %v415, %v416
          %v418 = vrot.slane %v417, 1
          %v419 = vadd.f32 %v417, %v418
          %s420 = vtos %v419
          %v421 = vstv %s420
          %v422 = vmul.f32 %v421, %v405
          %v423 = vld [vmem:[%s3] sm:$0xff]
          %v424 = vadd.f32 %v422, 1e-05
          %v425 = vrsqrt.pop %v424
          %v426 = vmul.f32 %v423, %v425
          %v427 = vld [vmem:[%s4] sm:$0xff]
          %v428 = vmul.f32 %v406, %v426
          %v429 = vsub.f32 %v427, %v428
          %431 = vset.pattern.permute.xlu0 0
          %432 = vperm.xlu0 %431, %v426
          %v433 = vpop.permute.xlu0 %432
          %v435 = vmul.f32 %v392, %v433
          %v436 = vmul.f32 %v393, %v433
          %438 = vset.pattern.permute.xlu0 0
          %439 = vperm.xlu0 %438, %v429
          %v440 = vpop.permute.xlu0 %439
          %v442 = vadd.f32 %v435, %v440
          %v443 = vadd.f32 %v436, %v440
          %v444 = vmax.f32 %v442, 0.0
          %v445 = vmax.f32 %v443, 0.0
          %446 = vst [vmem:[%s291] sm:$0xff] %v444
          %447 = vst [vmem:[%s291 + $0x8] sm:$0xff] %v445
        $region82: #{conv_normalize_relu.1} parent=73 // pred_fallthru
          _
        %p448 = scmp.lt.s32.totalorder %s20, 1
        %s449 = scalar_select %p448, %s20, 1
        %s450 = smul.addr %s449, 2
        %s451 = smul.addr %s450, 8
        %s452 = scalar_lea.vmem %s5, %s451
        // Predicated region
        $region83: #{conv_normalize_relu.1} parent=73 // pred_check
          %p453 = pneg %p158
        $region84: #{conv_normalize_relu.1} parent=73 // pred_check_branch
          %455 = sbr.rel (%p453) target = $region86
        $region85: #{conv_normalize_relu.1} parent=73 // pred_region
          _
        $region86: #{conv_normalize_relu.1} parent=73 // pred_fallthru
          _
      $region74: #{conv_normalize_relu.1} parent=5 // pred_fallthru
        _
      %p456 = scmp.le.s32.totalorder 2, %s11
      // Predicated region
      $region87: #{conv_normalize_relu.1} parent=5 // pred_check
        %p457 = pneg %p456
      $region88: #{conv_normalize_relu.1} parent=5 // pred_check_branch
        %459 = sbr.rel (%p457) target = $region90
      $region89: #{conv_normalize_relu.1} parent=5 // pred_region
        %s460 = ssub.s32 %s11, 2
        // Predicated region
        $region91: #{conv_normalize_relu.1} parent=89 // pred_check
          %p461 = pneg %p164
        $region92: #{conv_normalize_relu.1} parent=89 // pred_check_branch
          %463 = sbr.rel (%p461) target = $region94
        $region93: #{conv_normalize_relu.1} parent=89 // pred_region
          %p464 = scmp.lt.s32.totalorder %s22, 1
          %s465 = scalar_select %p464, %s22, 1
          %s466 = smul.addr %s465, 2
          %s467 = smul.addr %s466, 8
          %s468 = scalar_lea.vmem %s5, %s467
        $region94: #{conv_normalize_relu.1} parent=89 // pred_fallthru
          _
      $region90: #{conv_normalize_relu.1} parent=5 // pred_fallthru
        _
    $region6: #{conv_normalize_relu.1} parent=1 // loop_footer
      %s15 = sadd.s32 1, %s11
    $region7: #{conv_normalize_relu.1} parent=1 // loop_footer_branch
      %10 = sbr.rel target = $region3
    $region8: #{conv_normalize_relu.1} parent=1 // loop_exit
      _

</llo_original>
